<compile_context>
chip_gen: v6e
topology: v6e:2x2x1
jax: 0.10.0
libtpu: 0.0.40
codegen_flags: <defaults>
</compile_context>

<pallas_src>
import jax
import jax.numpy as jnp
from jax.experimental import pallas as pl
from jax.experimental.pallas import tpu as pltpu


def _make_fused_kernel(k_max: int, T: int):
    """Fused conv(k=2..k_max) + bias + ReLU + mask + max-pool + FC kernel.

    Processes one batch element per grid step.
      x_ref   : (1, T + k_max - 1, D)   zero-padded sentence
      w_ref   : (k_max, D, NBF)         filter-concatenated, k-padded conv weights
      b_ref   : (1, NBF)                concatenated conv biases
      m_ref   : (T, NBF)                0 for valid conv positions, -1e30 otherwise
      fcw_ref : (NBF, LPAD)             FC weight, padded to lane-dense LPAD cols
      fcb_ref : (1, LPAD)               FC bias, padded
      o_ref   : (1, 1, LPAD)            logits (padded)
    """

    def kernel(x_ref, w_ref, b_ref, m_ref, fcw_ref, fcb_ref, o_ref):
        x = x_ref[0]                                        # (S_pad, D)
        nbf = w_ref.shape[-1]

        # Conv for all branches at once: k_max shifted matmuls against the
        # filter-concatenated weight (equivalent to the (T, k_max*D) im2col
        # matmul, but streams x through the MXU without materializing a copy).
        acc = jnp.zeros((T, nbf), jnp.float32)
        for j in range(k_max):                              # static unroll
            acc = acc + jnp.dot(x[j:j + T, :], w_ref[j],
                                preferred_element_type=jnp.float32)

        # bias + ReLU once on the whole slab, then mask out per-branch
        # out-of-range positions before the max-pool.
        acc = jnp.maximum(acc + b_ref[...], 0.0) + m_ref[...]
        pooled = jnp.max(acc, axis=0, keepdims=True)        # (1, NBF)

        # Fused FC (dropout is identity at inference time).
        o_ref[0] = (jnp.dot(pooled, fcw_ref[...],
                            preferred_element_type=jnp.float32)
                    + fcb_ref[...]).astype(o_ref.dtype)

    return kernel


def text_cnn_forward(x, params, kernel_list):
    """x: (B, 1, S, D) float32 (PyTorch NCHW with channel=1) -> (B, label_size)."""
    xs = x[:, 0, :, :]                                      # (B, S, D)
    B, S, D = xs.shape
    k_max = max(kernel_list)
    NB = len(kernel_list)
    F = params[f"conv{kernel_list[0]}_w"].shape[-1]
    NBF = NB * F                                            # lane-dense (128 here)
    L = params["fc_w"].shape[-1]
    LPAD = max(128, pl.cdiv(L, 128) * 128)                  # lane-dense FC output

    # ---- one-time parameter packing (outside the kernel) -------------------
    w_cat = jnp.zeros((k_max, D, NBF), jnp.float32)
    b_cat = jnp.zeros((1, NBF), jnp.float32)
    for i, k in enumerate(kernel_list):
        w_cat = w_cat.at[:k, :, i * F:(i + 1) * F].set(params[f"conv{k}_w"])
        b_cat = b_cat.at[:, i * F:(i + 1) * F].set(params[f"conv{k}_b"])

    # Position-validity mask: position t is valid for branch k iff t <= S - k.
    pos = jnp.arange(S, dtype=jnp.int32)[:, None]           # (S, 1)
    limits = jnp.concatenate(
        [jnp.full((1, F), S - k, jnp.int32) for k in kernel_list], axis=1)
    neg_mask = jnp.where(pos <= limits, 0.0, -1e30).astype(jnp.float32)  # (S,NBF)

    fc_w = jnp.zeros((NBF, LPAD), jnp.float32).at[:, :L].set(params["fc_w"])
    fc_b = jnp.zeros((1, LPAD), jnp.float32).at[:, :L].set(params["fc_b"])

    # Zero-pad the sentence so every branch can use all S window positions.
    x_pad = jnp.pad(xs, ((0, 0), (0, k_max - 1), (0, 0)))   # (B, S+k_max-1, D)
    S_pad = S + k_max - 1

    kernel = _make_fused_kernel(k_max=k_max, T=S)

    out = pl.pallas_call(
        kernel,
        out_shape=jax.ShapeDtypeStruct((B, 1, LPAD), jnp.float32),
        grid=(B,),
        in_specs=[
            pl.BlockSpec((1, S_pad, D), lambda b: (b, 0, 0)),      # x (per batch)
            pl.BlockSpec((k_max, D, NBF), lambda b: (0, 0, 0)),    # conv weights
            pl.BlockSpec((1, NBF), lambda b: (0, 0)),              # conv bias
            pl.BlockSpec((S, NBF), lambda b: (0, 0)),              # position mask
            pl.BlockSpec((NBF, LPAD), lambda b: (0, 0)),           # fc weight
            pl.BlockSpec((1, LPAD), lambda b: (0, 0)),             # fc bias
        ],
        out_specs=pl.BlockSpec((1, 1, LPAD), lambda b: (b, 0, 0)),
        compiler_params=pltpu.CompilerParams(
            dimension_semantics=("parallel",)),
    )(x_pad, w_cat, b_cat, neg_mask, fc_w, fc_b)

    # TODO(synk): training-mode stochastic dropout mask not implemented
    # (Dropout(0.5) is identity at inference time).
    return out[:, 0, :L]


def reference_forward(x, params, kernel_list):
    """Pure-jnp reference of the same math for a correctness check."""
    xs = x[:, 0, :, :]
    B, S, D = xs.shape
    pooled = []
    for k in kernel_list:
        w, b = params[f"conv{k}_w"], params[f"conv{k}_b"]
        So = S - k + 1
        acc = jnp.zeros((B, So, w.shape[-1]), jnp.float32)
        for j in range(k):
            acc = acc + jnp.einsum("bsd,df->bsf", xs[:, j:j + So, :], w[j])
        acc = jnp.maximum(acc + b[None], 0.0)
        pooled.append(jnp.max(acc, axis=1))
    feat = jnp.concatenate(pooled, axis=1)
    return feat @ params["fc_w"] + params["fc_b"]


if __name__ == "__main__":
    # Small shapes consistent with the module's forward semantics.
    B, S, D = 2, 16, 32          # batch, sentence_max_size, vec_dim
    filter_num = 32
    label_size = 2
    kernel_list = [2, 3, 4, 5]

    key = jax.random.PRNGKey(0)
    keys = jax.random.split(key, 2 * len(kernel_list) + 3)

    params = {}
    for i, k in enumerate(kernel_list):
        params[f"conv{k}_w"] = 0.1 * jax.random.normal(
            keys[2 * i], (k, D, filter_num), jnp.float32)
        params[f"conv{k}_b"] = 0.1 * jax.random.normal(
            keys[2 * i + 1], (1, filter_num), jnp.float32)
    params["fc_w"] = 0.1 * jax.random.normal(
        keys[-3], (filter_num * len(kernel_list), label_size), jnp.float32)
    params["fc_b"] = 0.1 * jax.random.normal(
        keys[-2], (1, label_size), jnp.float32)

    x = jax.random.normal(keys[-1], (B, 1, S, D), jnp.float32)

    out = jax.block_until_ready(text_cnn_forward(x, params, kernel_list))
    ref = reference_forward(x, params, kernel_list)

    assert out.shape == (B, label_size), out.shape
    assert jnp.allclose(out, ref, atol=1e-4), "Pallas output mismatch vs reference"
    print("KERNEL_OK")
</pallas_src>

<mosaic_0001>
module attributes {stable_mosaic.version = 11 : i64} {
  func.func @kernel(%arg0: i32, %arg1: memref<1x20x32xf32, #tpu.memory_space<vmem>>, %arg2: memref<5x32x128xf32, #tpu.memory_space<vmem>>, %arg3: memref<1x128xf32, #tpu.memory_space<vmem>>, %arg4: memref<16x128xf32, #tpu.memory_space<vmem>>, %arg5: memref<128x128xf32, #tpu.memory_space<vmem>>, %arg6: memref<1x128xf32, #tpu.memory_space<vmem>>, %arg7: memref<1x1x128xf32, #tpu.memory_space<vmem>>) attributes {dimension_semantics = [#tpu.dimension_semantics<parallel>], iteration_bounds = array<i64: 2>, scalar_prefetch = 0 : i64, scratch_operands = 0 : i64, tpu.core_type = #tpu.core_type<tc>, window_params = [{transform_indices = @transform_0, window_bounds = array<i64: 1, 20, 32>}, {pipeline_mode = #tpu.pipeline_mode<synchronous>, transform_indices = @transform_1, window_bounds = array<i64: 5, 32, 128>}, {pipeline_mode = #tpu.pipeline_mode<synchronous>, transform_indices = @transform_2, window_bounds = array<i64: 1, 128>}, {pipeline_mode = #tpu.pipeline_mode<synchronous>, transform_indices = @transform_3, window_bounds = array<i64: 16, 128>}, {pipeline_mode = #tpu.pipeline_mode<synchronous>, transform_indices = @transform_4, window_bounds = array<i64: 128, 128>}, {pipeline_mode = #tpu.pipeline_mode<synchronous>, transform_indices = @transform_5, window_bounds = array<i64: 1, 128>}, {transform_indices = @transform_6, window_bounds = array<i64: 1, 1, 128>}]} {
    %c0 = arith.constant 0 : index
    %c0_0 = arith.constant 0 : index
    %c0_1 = arith.constant 0 : index
    %0 = vector.load %arg1[%c0, %c0_0, %c0_1] : memref<1x20x32xf32, #tpu.memory_space<vmem>>, vector<1x20x32xf32>
    %1 = vector.shape_cast %0 : vector<1x20x32xf32> to vector<20x32xf32>
    %cst = arith.constant 0.000000e+00 : f32
    %2 = vector.broadcast %cst : f32 to vector<16x128xf32>
    %3 = vector.extract_strided_slice %1 {offsets = [0, 0], sizes = [16, 32], strides = [1, 1]} : vector<20x32xf32> to vector<16x32xf32>
    %c0_2 = arith.constant 0 : index
    %c0_3 = arith.constant 0 : index
    %c0_4 = arith.constant 0 : index
    %4 = vector.load %arg2[%c0_2, %c0_3, %c0_4] : memref<5x32x128xf32, #tpu.memory_space<vmem>>, vector<1x32x128xf32>
    %5 = vector.shape_cast %4 : vector<1x32x128xf32> to vector<32x128xf32>
    %cst_5 = arith.constant dense<0.000000e+00> : vector<16x128xf32>
    %6 = tpu.matmul %3, %5, %cst_5 {dimension_numbers = #tpu.dot_dimension_numbers<[1], [0], [0], [1], [0, 0, 1, 1], [], []>} : vector<16x32xf32>, vector<32x128xf32>, vector<16x128xf32> -> vector<16x128xf32>
    %7 = arith.addf %2, %6 : vector<16x128xf32>
    %8 = vector.extract_strided_slice %1 {offsets = [1, 0], sizes = [16, 32], strides = [1, 1]} : vector<20x32xf32> to vector<16x32xf32>
    %c1 = arith.constant 1 : index
    %c0_6 = arith.constant 0 : index
    %c0_7 = arith.constant 0 : index
    %9 = vector.load %arg2[%c1, %c0_6, %c0_7] : memref<5x32x128xf32, #tpu.memory_space<vmem>>, vector<1x32x128xf32>
    %10 = vector.shape_cast %9 : vector<1x32x128xf32> to vector<32x128xf32>
    %cst_8 = arith.constant dense<0.000000e+00> : vector<16x128xf32>
    %11 = tpu.matmul %8, %10, %cst_8 {dimension_numbers = #tpu.dot_dimension_numbers<[1], [0], [0], [1], [0, 0, 1, 1], [], []>} : vector<16x32xf32>, vector<32x128xf32>, vector<16x128xf32> -> vector<16x128xf32>
    %12 = arith.addf %7, %11 : vector<16x128xf32>
    %13 = vector.extract_strided_slice %1 {offsets = [2, 0], sizes = [16, 32], strides = [1, 1]} : vector<20x32xf32> to vector<16x32xf32>
    %c2 = arith.constant 2 : index
    %c0_9 = arith.constant 0 : index
    %c0_10 = arith.constant 0 : index
    %14 = vector.load %arg2[%c2, %c0_9, %c0_10] : memref<5x32x128xf32, #tpu.memory_space<vmem>>, vector<1x32x128xf32>
    %15 = vector.shape_cast %14 : vector<1x32x128xf32> to vector<32x128xf32>
    %cst_11 = arith.constant dense<0.000000e+00> : vector<16x128xf32>
    %16 = tpu.matmul %13, %15, %cst_11 {dimension_numbers = #tpu.dot_dimension_numbers<[1], [0], [0], [1], [0, 0, 1, 1], [], []>} : vector<16x32xf32>, vector<32x128xf32>, vector<16x128xf32> -> vector<16x128xf32>
    %17 = arith.addf %12, %16 : vector<16x128xf32>
    %18 = vector.extract_strided_slice %1 {offsets = [3, 0], sizes = [16, 32], strides = [1, 1]} : vector<20x32xf32> to vector<16x32xf32>
    %c3 = arith.constant 3 : index
    %c0_12 = arith.constant 0 : index
    %c0_13 = arith.constant 0 : index
    %19 = vector.load %arg2[%c3, %c0_12, %c0_13] : memref<5x32x128xf32, #tpu.memory_space<vmem>>, vector<1x32x128xf32>
    %20 = vector.shape_cast %19 : vector<1x32x128xf32> to vector<32x128xf32>
    %cst_14 = arith.constant dense<0.000000e+00> : vector<16x128xf32>
    %21 = tpu.matmul %18, %20, %cst_14 {dimension_numbers = #tpu.dot_dimension_numbers<[1], [0], [0], [1], [0, 0, 1, 1], [], []>} : vector<16x32xf32>, vector<32x128xf32>, vector<16x128xf32> -> vector<16x128xf32>
    %22 = arith.addf %17, %21 : vector<16x128xf32>
    %23 = vector.extract_strided_slice %1 {offsets = [4, 0], sizes = [16, 32], strides = [1, 1]} : vector<20x32xf32> to vector<16x32xf32>
    %c4 = arith.constant 4 : index
    %c0_15 = arith.constant 0 : index
    %c0_16 = arith.constant 0 : index
    %24 = vector.load %arg2[%c4, %c0_15, %c0_16] : memref<5x32x128xf32, #tpu.memory_space<vmem>>, vector<1x32x128xf32>
    %25 = vector.shape_cast %24 : vector<1x32x128xf32> to vector<32x128xf32>
    %cst_17 = arith.constant dense<0.000000e+00> : vector<16x128xf32>
    %26 = tpu.matmul %23, %25, %cst_17 {dimension_numbers = #tpu.dot_dimension_numbers<[1], [0], [0], [1], [0, 0, 1, 1], [], []>} : vector<16x32xf32>, vector<32x128xf32>, vector<16x128xf32> -> vector<16x128xf32>
    %27 = arith.addf %22, %26 : vector<16x128xf32>
    %c0_18 = arith.constant 0 : index
    %c0_19 = arith.constant 0 : index
    %28 = vector.load %arg3[%c0_18, %c0_19] : memref<1x128xf32, #tpu.memory_space<vmem>>, vector<1x128xf32>
    %29 = vector.broadcast %28 : vector<1x128xf32> to vector<16x128xf32>
    %30 = arith.addf %27, %29 : vector<16x128xf32>
    %cst_20 = arith.constant 0.000000e+00 : f32
    %31 = vector.broadcast %cst_20 : f32 to vector<16x128xf32>
    %32 = arith.maximumf %30, %31 : vector<16x128xf32>
    %c0_21 = arith.constant 0 : index
    %c0_22 = arith.constant 0 : index
    %33 = vector.load %arg4[%c0_21, %c0_22] : memref<16x128xf32, #tpu.memory_space<vmem>>, vector<16x128xf32>
    %34 = arith.addf %32, %33 : vector<16x128xf32>
    %cst_23 = arith.constant dense<0xFF800000> : vector<128xf32>
    %35 = vector.multi_reduction <maximumf>, %34, %cst_23 [0] : vector<16x128xf32> to vector<128xf32>
    %36 = vector.shape_cast %35 : vector<128xf32> to vector<1x128xf32>
    %c0_24 = arith.constant 0 : index
    %c0_25 = arith.constant 0 : index
    %37 = vector.load %arg5[%c0_24, %c0_25] : memref<128x128xf32, #tpu.memory_space<vmem>>, vector<128x128xf32>
    %cst_26 = arith.constant dense<0.000000e+00> : vector<1x128xf32>
    %38 = tpu.matmul %36, %37, %cst_26 {dimension_numbers = #tpu.dot_dimension_numbers<[1], [0], [0], [1], [0, 0, 1, 1], [], []>} : vector<1x128xf32>, vector<128x128xf32>, vector<1x128xf32> -> vector<1x128xf32>
    %c0_27 = arith.constant 0 : index
    %c0_28 = arith.constant 0 : index
    %39 = vector.load %arg6[%c0_27, %c0_28] : memref<1x128xf32, #tpu.memory_space<vmem>>, vector<1x128xf32>
    %40 = arith.addf %38, %39 : vector<1x128xf32>
    %c0_29 = arith.constant 0 : index
    %c0_30 = arith.constant 0 : index
    %c0_31 = arith.constant 0 : index
    %41 = vector.load %arg7[%c0_29, %c0_30, %c0_31] : memref<1x1x128xf32, #tpu.memory_space<vmem>>, vector<1x1x128xf32>
    %42 = vector.shape_cast %41 : vector<1x1x128xf32> to vector<1x128xf32>
    %43 = vector.shape_cast %40 : vector<1x128xf32> to vector<1x1x128xf32>
    tpu.vector_store %arg7[%c0_29, %c0_30, %c0_31], %43 {strides = array<i32>} : memref<1x1x128xf32, #tpu.memory_space<vmem>>, vector<1x1x128xf32>,
    return
  }
  func.func @transform_0(%arg0: i32) -> (i32, i32, i32) {
    %c0_i32 = arith.constant 0 : i32
    %c0_i32_0 = arith.constant 0 : i32
    %c0_i32_1 = arith.constant 0 : i32
    return %arg0, %c0_i32, %c0_i32_0 : i32, i32, i32
  }
  func.func @transform_1(%arg0: i32) -> (i32, i32, i32) {
    %c0_i32 = arith.constant 0 : i32
    %c0_i32_0 = arith.constant 0 : i32
    %c0_i32_1 = arith.constant 0 : i32
    %c0_i32_2 = arith.constant 0 : i32
    return %c0_i32, %c0_i32_0, %c0_i32_1 : i32, i32, i32
  }
  func.func @transform_2(%arg0: i32) -> (i32, i32) {
    %c0_i32 = arith.constant 0 : i32
    %c0_i32_0 = arith.constant 0 : i32
    %c0_i32_1 = arith.constant 0 : i32
    return %c0_i32, %c0_i32_0 : i32, i32
  }
  func.func @transform_3(%arg0: i32) -> (i32, i32) {
    %c0_i32 = arith.constant 0 : i32
    %c0_i32_0 = arith.constant 0 : i32
    %c0_i32_1 = arith.constant 0 : i32
    return %c0_i32, %c0_i32_0 : i32, i32
  }
  func.func @transform_4(%arg0: i32) -> (i32, i32) {
    %c0_i32 = arith.constant 0 : i32
    %c0_i32_0 = arith.constant 0 : i32
    %c0_i32_1 = arith.constant 0 : i32
    return %c0_i32, %c0_i32_0 : i32, i32
  }
  func.func @transform_5(%arg0: i32) -> (i32, i32) {
    %c0_i32 = arith.constant 0 : i32
    %c0_i32_0 = arith.constant 0 : i32
    %c0_i32_1 = arith.constant 0 : i32
    return %c0_i32, %c0_i32_0 : i32, i32
  }
  func.func @transform_6(%arg0: i32) -> (i32, i32, i32) {
    %c0_i32 = arith.constant 0 : i32
    %c0_i32_0 = arith.constant 0 : i32
    %c0_i32_1 = arith.constant 0 : i32
    return %arg0, %c0_i32, %c0_i32_0 : i32, i32, i32
  }
}

</mosaic_0001>

<llo_original>
// kernel: tpu_custom_call.1
$region0: #{tpu_custom_call.1}
  #allocation0 [shape = 'u32[]', space=smem, size = 0x4, offset = 0x4, fixed_abs, tag = 'smem constant byte address 0x4 - core index']
  #allocation1 [shape = 'u32[144,128]{1,0:T(1,128)}', space=vmem, size = 0x12000, scoped, tag = 'internal scratch']
  %s0 = inlined_call_operand.vmem [shape: f32[2,20,32], index: 0, kind: input, shape index: {}]
  %s1 = inlined_call_operand.hbm [shape: f32[5,32,128], index: 1, kind: input, shape index: {}]
  %s2 = inlined_call_operand.vmem [shape: f32[1,128], index: 2, kind: input, shape index: {}]
  %s3 = inlined_call_operand.vmem [shape: f32[16,128], index: 3, kind: input, shape index: {}]
  %s4 = inlined_call_operand.hbm [shape: f32[128,128], index: 4, kind: input, shape index: {}]
  %s5 = inlined_call_operand.vmem [shape: f32[1,128], index: 5, kind: input, shape index: {}]
  %s6 = inlined_call_operand.hbm [shape: f32[2,1,128], index: 6, kind: output, shape index: {}]
  %s7 = sld [smem:[#allocation0]]
  $region65: #{tpu_custom_call.1} parent=0
    _
  %s9 = ssub.s32 1, %s7
  %s10 = scalar_select 0, %s9, %s7
  $region1: #{tpu_custom_call.1} parent=0
    #allocation2 [shape = 'u8[81920]{0}', space=vmem, size = 0x14000, scoped, tag = 'input window, operand 1, single buffered']
    #allocation3 [shape = 's32[2]{0}', space=sflag, size = 0x8, scoped, tag = 'scoped memory for tpu_custom_call.1']
    #allocation4 [shape = 's32[2]{0}', space=sflag, size = 0x8, scoped, tag = 'scoped memory for tpu_custom_call.1']
    #allocation5 [shape = 'u8[65536]{0}', space=vmem, size = 0x10000, scoped, tag = 'input window, operand 4, single buffered']
    #allocation6 [shape = 's32[1]{0}', space=sflag, size = 0x4, scoped, tag = 'scoped memory for tpu_custom_call.1']
    #allocation7 [shape = 'u8[1024]{0}', space=vmem, size = 0x400, scoped, tag = 'output window, operand 0']
    %11 = vsyncpa [#allocation3], 0
    %12 = vsyncpa [#allocation6], 0
    %13 = vsyncpa [#allocation4], 0
    %s14 = scalar_lea.sflag [#allocation4], 1
    %15 = vsyncpa %s14, 0
    loop: start=0, step=1, limit=4
    $region2: #{tpu_custom_call.1} parent=1 // loop_pre_header
      _
    $region3: #{tpu_custom_call.1} parent=1 // loop_header
      %s17 = sphi 0, %s21
      %p18 = scmp.ge.s32.totalorder %s17, 4
      %s27 = sphi 0, %s29
      %s30 = sphi 0, %s27
      %s31 = sphi 0, %s30
      %s47 = sphi 0, %s31
      %s51 = sphi 0, %s51
      %s53 = sphi 0, %s51
      %s54 = sphi 0, %s53
      %s68 = sphi 0, %s54
      %s72 = sphi 0, %s72
      %s74 = sphi 0, %s72
      %s75 = sphi 0, %s74
      %s89 = sphi 0, %s75
      %s93 = sphi 0, %s93
      %s95 = sphi 0, %s93
      %s96 = sphi 0, %s95
      %s110 = sphi 0, %s96
      %s114 = sphi 0, %s114
      %s116 = sphi 0, %s114
      %s117 = sphi 0, %s116
      %s131 = sphi 0, %s117
      %s135 = sphi 0, %s135
      %s137 = sphi 0, %s135
      %s138 = sphi 0, %s137
      %s152 = sphi 0, %s138
      %s158 = sphi 0, %s160
      %s161 = sphi 0, %s158
      %s162 = sphi 0, %s161
      %s178 = sphi 0, %s162
    $region4: #{tpu_custom_call.1} parent=1 // loop_header_branch
      %20 = sbr.rel (%p18) target = $region8
    $region5: #{tpu_custom_call.1} parent=1 // loop_body
      %s22 = ssub.s32 %s17, 1
      %s23 = ssub.s32 %s17, 2
      %s24 = sadd.s32 %s17, 1
      %s25 = ssub.s32 %s17, %s24
      %p26 = scmp.eq.s32.totalorder %s25, 0
      %s28 = sadd.s32 %s27, 1
      %s29 = scalar_select %p26, %s27, %s28
      %p32 = pneg %p26
      %p33 = scmp.eq.s32.totalorder %s17, 1
      %p34 = por %p32, %p33
      %p35 = scmp.ne.s32.totalorder %s27, %s30
      %p36 = scmp.eq.s32.totalorder %s17, 0
      %p37 = por %p35, %p36
      %p38 = scmp.ne.s32.totalorder %s27, %s30
      %p39 = scmp.eq.s32.totalorder %s22, 1
      %p40 = por %p38, %p39
      %p41 = scmp.ne.s32.totalorder %s30, %s31
      %p42 = scmp.eq.s32.totalorder %s22, 0
      %p43 = por %p41, %p42
      %p44 = scmp.ne.s32.totalorder %s30, %s31
      %p45 = scmp.eq.s32.totalorder %s23, 1
      %p46 = por %p44, %p45
      %p48 = scmp.ne.s32.totalorder %s31, %s47
      %p49 = scmp.eq.s32.totalorder %s23, 0
      %p50 = por %p48, %p49
      %s52 = sadd.s32 %s51, 1
      %p55 = scmp.eq.s32.totalorder %s17, 1
      %p56 = scmp.ne.s32.totalorder %s51, %s53
      %p57 = scmp.eq.s32.totalorder %s17, 0
      %p58 = por %p56, %p57
      %p59 = scmp.ne.s32.totalorder %s51, %s53
      %p60 = scmp.eq.s32.totalorder %s22, 1
      %p61 = por %p59, %p60
      %p62 = scmp.ne.s32.totalorder %s53, %s54
      %p63 = scmp.eq.s32.totalorder %s22, 0
      %p64 = por %p62, %p63
      %p65 = scmp.ne.s32.totalorder %s53, %s54
      %p66 = scmp.eq.s32.totalorder %s23, 1
      %p67 = por %p65, %p66
      %p69 = scmp.ne.s32.totalorder %s54, %s68
      %p70 = scmp.eq.s32.totalorder %s23, 0
      %p71 = por %p69, %p70
      %s73 = sadd.s32 %s72, 1
      %p76 = scmp.eq.s32.totalorder %s17, 1
      %p77 = scmp.ne.s32.totalorder %s72, %s74
      %p78 = scmp.eq.s32.totalorder %s17, 0
      %p79 = por %p77, %p78
      %p80 = scmp.ne.s32.totalorder %s72, %s74
      %p81 = scmp.eq.s32.totalorder %s22, 1
      %p82 = por %p80, %p81
      %p83 = scmp.ne.s32.totalorder %s74, %s75
      %p84 = scmp.eq.s32.totalorder %s22, 0
      %p85 = por %p83, %p84
      %p86 = scmp.ne.s32.totalorder %s74, %s75
      %p87 = scmp.eq.s32.totalorder %s23, 1
      %p88 = por %p86, %p87
      %p90 = scmp.ne.s32.totalorder %s75, %s89
      %p91 = scmp.eq.s32.totalorder %s23, 0
      %p92 = por %p90, %p91
      %s94 = sadd.s32 %s93, 1
      %p97 = scmp.eq.s32.totalorder %s17, 1
      %p98 = scmp.ne.s32.totalorder %s93, %s95
      %p99 = scmp.eq.s32.totalorder %s17, 0
      %p100 = por %p98, %p99
      %p101 = scmp.ne.s32.totalorder %s93, %s95
      %p102 = scmp.eq.s32.totalorder %s22, 1
      %p103 = por %p101, %p102
      %p104 = scmp.ne.s32.totalorder %s95, %s96
      %p105 = scmp.eq.s32.totalorder %s22, 0
      %p106 = por %p104, %p105
      %p107 = scmp.ne.s32.totalorder %s95, %s96
      %p108 = scmp.eq.s32.totalorder %s23, 1
      %p109 = por %p107, %p108
      %p111 = scmp.ne.s32.totalorder %s96, %s110
      %p112 = scmp.eq.s32.totalorder %s23, 0
      %p113 = por %p111, %p112
      %s115 = sadd.s32 %s114, 1
      %p118 = scmp.eq.s32.totalorder %s17, 1
      %p119 = scmp.ne.s32.totalorder %s114, %s116
      %p120 = scmp.eq.s32.totalorder %s17, 0
      %p121 = por %p119, %p120
      %p122 = scmp.ne.s32.totalorder %s114, %s116
      %p123 = scmp.eq.s32.totalorder %s22, 1
      %p124 = por %p122, %p123
      %p125 = scmp.ne.s32.totalorder %s116, %s117
      %p126 = scmp.eq.s32.totalorder %s22, 0
      %p127 = por %p125, %p126
      %p128 = scmp.ne.s32.totalorder %s116, %s117
      %p129 = scmp.eq.s32.totalorder %s23, 1
      %p130 = por %p128, %p129
      %p132 = scmp.ne.s32.totalorder %s117, %s131
      %p133 = scmp.eq.s32.totalorder %s23, 0
      %p134 = por %p132, %p133
      %s136 = sadd.s32 %s135, 1
      %p139 = scmp.eq.s32.totalorder %s17, 1
      %p140 = scmp.ne.s32.totalorder %s135, %s137
      %p141 = scmp.eq.s32.totalorder %s17, 0
      %p142 = por %p140, %p141
      %p143 = scmp.ne.s32.totalorder %s135, %s137
      %p144 = scmp.eq.s32.totalorder %s22, 1
      %p145 = por %p143, %p144
      %p146 = scmp.ne.s32.totalorder %s137, %s138
      %p147 = scmp.eq.s32.totalorder %s22, 0
      %p148 = por %p146, %p147
      %p149 = scmp.ne.s32.totalorder %s137, %s138
      %p150 = scmp.eq.s32.totalorder %s23, 1
      %p151 = por %p149, %p150
      %p153 = scmp.ne.s32.totalorder %s138, %s152
      %p154 = scmp.eq.s32.totalorder %s23, 0
      %p155 = por %p153, %p154
      %s156 = ssub.s32 %s17, %s24
      %p157 = scmp.eq.s32.totalorder %s156, 0
      %s159 = sadd.s32 %s158, 1
      %s160 = scalar_select %p157, %s158, %s159
      %p163 = pneg %p157
      %p164 = scmp.eq.s32.totalorder %s17, 1
      %p165 = por %p163, %p164
      %p166 = scmp.ne.s32.totalorder %s158, %s161
      %p167 = scmp.eq.s32.totalorder %s17, 0
      %p168 = por %p166, %p167
      %p169 = scmp.ne.s32.totalorder %s158, %s161
      %p170 = scmp.eq.s32.totalorder %s22, 1
      %p171 = por %p169, %p170
      %p172 = scmp.ne.s32.totalorder %s161, %s162
      %p173 = scmp.eq.s32.totalorder %s22, 0
      %p174 = por %p172, %p173
      %p175 = scmp.ne.s32.totalorder %s161, %s162
      %p176 = scmp.eq.s32.totalorder %s23, 1
      %p177 = por %p175, %p176
      %p179 = scmp.ne.s32.totalorder %s162, %s178
      %p180 = scmp.eq.s32.totalorder %s23, 0
      %p181 = por %p179, %p180
      %p182 = scmp.le.s32.totalorder 1, %s17
      %p183 = scmp.lt.s32.totalorder %s17, 3
      %p184 = pnand %p182, %p183
      %p185 = pneg %p184
      // Predicated region
      $region9: #{tpu_custom_call.1} parent=5 // pred_check
        _
      $region10: #{tpu_custom_call.1} parent=5 // pred_check_branch
        %187 = sbr.rel (%p184) target = $region12
      $region11: #{tpu_custom_call.1} parent=5 // pred_region
        %s188 = ssub.s32 %s17, 1
        // Predicated region
        $region13: #{tpu_custom_call.1} parent=11 // pred_check
          %p189 = pneg %p64
        $region14: #{tpu_custom_call.1} parent=11 // pred_check_branch
          %191 = sbr.rel (%p189) target = $region16
        $region15: #{tpu_custom_call.1} parent=11 // pred_region
          %s193 = ssub.s32 2560, 2560
          %194 = vsyncadd [#allocation3], %s193
          %s195 = sshll.u32 [#allocation2], 4
          %s196 = int_to_ptr.vmem [resolvable:$true] %s195
          %201 = dma.hbm_to_vmem [thread:$0]  %s1, 2560, %s196, [#allocation3], 128, 128, 8
        $region16: #{tpu_custom_call.1} parent=11 // pred_fallthru
          _
        // Predicated region
        $region17: #{tpu_custom_call.1} parent=11 // pred_check
          %p202 = pneg %p85
        $region18: #{tpu_custom_call.1} parent=11 // pred_check_branch
          %204 = sbr.rel (%p202) target = $region20
        $region19: #{tpu_custom_call.1} parent=11 // pred_region
          _
        $region20: #{tpu_custom_call.1} parent=11 // pred_fallthru
          _
        // Predicated region
        $region21: #{tpu_custom_call.1} parent=11 // pred_check
          %p205 = pneg %p106
        $region22: #{tpu_custom_call.1} parent=11 // pred_check_branch
          %207 = sbr.rel (%p205) target = $region24
        $region23: #{tpu_custom_call.1} parent=11 // pred_region
          _
        $region24: #{tpu_custom_call.1} parent=11 // pred_fallthru
          _
        // Predicated region
        $region25: #{tpu_custom_call.1} parent=11 // pred_check
          %p208 = pneg %p127
        $region26: #{tpu_custom_call.1} parent=11 // pred_check_branch
          %210 = sbr.rel (%p208) target = $region28
        $region27: #{tpu_custom_call.1} parent=11 // pred_region
          %s212 = ssub.s32 2048, 2048
          %213 = vsyncadd [#allocation6], %s212
          %s214 = sshll.u32 [#allocation5], 4
          %s215 = int_to_ptr.vmem [resolvable:$true] %s214
          %220 = dma.hbm_to_vmem [thread:$0]  %s4, 2048, %s215, [#allocation6], 128, 128, 8
        $region28: #{tpu_custom_call.1} parent=11 // pred_fallthru
          _
        // Predicated region
        $region29: #{tpu_custom_call.1} parent=11 // pred_check
          %p221 = pneg %p148
        $region30: #{tpu_custom_call.1} parent=11 // pred_check_branch
          %223 = sbr.rel (%p221) target = $region32
        $region31: #{tpu_custom_call.1} parent=11 // pred_region
          _
        $region32: #{tpu_custom_call.1} parent=11 // pred_fallthru
          _
      $region12: #{tpu_custom_call.1} parent=5 // pred_fallthru
        _
      %p224 = scmp.lt.s32.totalorder %s17, 2
      // Predicated region
      $region33: #{tpu_custom_call.1} parent=5 // pred_check
        %p225 = pneg %p224
      $region34: #{tpu_custom_call.1} parent=5 // pred_check_branch
        %227 = sbr.rel (%p225) target = $region36
      $region35: #{tpu_custom_call.1} parent=5 // pred_region
        // Predicated region
        $region37: #{tpu_custom_call.1} parent=35 // pred_check
          %p228 = pneg %p37
        $region38: #{tpu_custom_call.1} parent=35 // pred_check_branch
          %230 = sbr.rel (%p228) target = $region40
        $region39: #{tpu_custom_call.1} parent=35 // pred_region
          %p231 = scmp.lt.s32.totalorder %s17, 1
          %s232 = scalar_select %p231, %s17, 1
          %s233 = smul.addr %s232, 3
          %s234 = smul.addr %s233, 8
          %s235 = scalar_lea.vmem %s0, %s234
        $region40: #{tpu_custom_call.1} parent=35 // pred_fallthru
          _
      $region36: #{tpu_custom_call.1} parent=5 // pred_fallthru
        _
      %p236 = scmp.le.s32.totalorder 1, %s17
      %p237 = scmp.lt.s32.totalorder %s17, 3
      %p238 = pnand %p236, %p237
      %p239 = pneg %p238
      // Predicated region
      $region41: #{tpu_custom_call.1} parent=5 // pred_check
        _
      $region42: #{tpu_custom_call.1} parent=5 // pred_check_branch
        %241 = sbr.rel (%p238) target = $region44
      $region43: #{tpu_custom_call.1} parent=5 // pred_region
        %s242 = ssub.s32 %s17, 1
        // Predicated region
        $region45: #{tpu_custom_call.1} parent=43 // pred_check
          %p243 = pneg %p64
        $region46: #{tpu_custom_call.1} parent=43 // pred_check_branch
          %245 = sbr.rel (%p243) target = $region48
        $region47: #{tpu_custom_call.1} parent=43 // pred_region
          %246 = dma.done [#allocation3], 2560
        $region48: #{tpu_custom_call.1} parent=43 // pred_fallthru
          _
        // Predicated region
        $region49: #{tpu_custom_call.1} parent=43 // pred_check
          %p247 = pneg %p127
        $region50: #{tpu_custom_call.1} parent=43 // pred_check_branch
          %249 = sbr.rel (%p247) target = $region52
        $region51: #{tpu_custom_call.1} parent=43 // pred_region
          %250 = dma.done [#allocation6], 2048
        $region52: #{tpu_custom_call.1} parent=43 // pred_fallthru
          _
        %p251 = scmp.lt.s32.totalorder %s22, 1
        %s252 = scalar_select %p251, %s22, 1
        %s253 = smul.addr %s252, 3
        %s254 = smul.addr %s253, 8
        %s255 = scalar_lea.vmem %s0, %s254
        %p256 = pneg %p43
        %p257 = pneg %p40
        %p258 = pneg %p64
        %p259 = pneg %p61
        %p260 = pneg %p85
        %p261 = pneg %p82
        %p262 = pneg %p106
        %p263 = pneg %p103
        %p264 = pneg %p127
        %p265 = pneg %p124
        %p266 = pneg %p148
        %p267 = pneg %p145
        %p268 = pneg %p174
        %p269 = pneg %p171
        %s270 = sand.u32 %s161, 1
        %s271 = scalar_lea.sflag [#allocation4], %s270
        %s272 = sand.u32 %s161, 1
        %s273 = scalar_lea.vmem [#allocation7], %s272
        %p274 = scmp.lt.s32.totalorder %s22, 1
        %s275 = scalar_select %p274, %s22, 1
        %s276 = smul.addr %s275, 3
        %s277 = smul.addr %s276, 8
        %s278 = scalar_lea.vmem %s0, %s277
        %v279 = vld [vmem:[%s278] sm:$0xff]
        %v280 = vld [vmem:[%s278 + $0x8] sm:$0xff]
        %v281 = vld [vmem:[%s278 + $0x10] sm:$0xf]
        %v282 = vld [vmem:[#allocation2] sm:$0xff]
        %v283 = vld [vmem:[#allocation2 + $0x8] sm:$0xff]
        %v284 = vld [vmem:[#allocation2 + $0x10] sm:$0xff]
        %v285 = vld [vmem:[#allocation2 + $0x18] sm:$0xff]
        %s286 = scalar_lea.vmem [#allocation2], 32
        %v287 = vld [vmem:[%s286] sm:$0xff]
        %v288 = vld [vmem:[%s286 + $0x8] sm:$0xff]
        %v289 = vld [vmem:[%s286 + $0x10] sm:$0xff]
        %v290 = vld [vmem:[%s286 + $0x18] sm:$0xff]
        %vm294 = vcmask 1046528
        %v295 = vrot.slane %v279, 1
        %v296 = vrot.slane %v280, 1
        %v297 = vsel %vm294, %v295, %v296
        %v298 = vrot.slane %v281, 1
        %v299 = vsel %vm294, %v296, %v298
        %vm300 = vcmask 261120
        %v301 = vsel %vm300, %v297, 0
        %v303 = vsel %vm300, %v299, 0
        %305 = vmatprep.subr.mxu0 0.0
        %306 = vmatpush1.msra.mxu0 0.0
        %307 = vmatprep.subr.mxu0 0.0
        %308 = vmatpush1.msra.mxu0 0.0
        %309 = vmatprep.subr.mxu0 0.0
        %310 = vmatpush1.msra.mxu0 0.0
        %311 = vmatprep.subr.mxu0 0.0
        %312 = vmatpush1.msra.mxu0 0.0
        %313 = vmatprep.subr.mxu0 0.0
        %314 = vmatpush1.msra.mxu0 0.0
        %315 = vmatprep.subr.mxu0 0.0
        %316 = vmatpush1.msra.mxu0 0.0
        %317 = vmatprep.subr.mxu0 0.0
        %318 = vmatpush1.msra.mxu0 0.0
        %319 = vmatprep.subr.mxu0 0.0
        %320 = vmatpush1.msra.mxu0 0.0
        %321 = vmatprep.subr.mxu0 0.0
        %322 = vmatpush1.msra.mxu0 0.0
        %323 = vmatprep.subr.mxu0 0.0
        %324 = vmatpush1.msra.mxu0 0.0
        %325 = vmatprep.subr.mxu0 0.0
        %326 = vmatpush1.msra.mxu0 0.0
        %327 = vmatprep.subr.mxu0 0.0
        %328 = vmatpush1.msra.mxu0 0.0
        %329 = vmatprep.subr.mxu0 0.0
        %330 = vmatpush1.msra.mxu0 %v290
        %331 = vmatprep.subr.mxu0 0.0
        %332 = vmatpush1.msra.mxu0 %v289
        %333 = vmatprep.subr.mxu0 0.0
        %334 = vmatpush1.msra.mxu0 %v288
        %335 = vmatprep.subr.mxu0 0.0
        %336 = vmatpush1.msra.mxu0 %v287
        %337 = vmatprep.subr.mxu0 0.0
        %338 = vmatpush2.msra.mxu0 0.0
        %339 = vmatprep.subr.mxu0 0.0
        %340 = vmatpush2.msra.mxu0 0.0
        %341 = vmatprep.subr.mxu0 0.0
        %342 = vmatpush2.msra.mxu0 0.0
        %343 = vmatprep.subr.mxu0 0.0
        %344 = vmatpush2.msra.mxu0 0.0
        %345 = vmatprep.subr.mxu0 0.0
        %346 = vmatpush2.msra.mxu0 0.0
        %347 = vmatprep.subr.mxu0 0.0
        %348 = vmatpush2.msra.mxu0 0.0
        %349 = vmatprep.subr.mxu0 0.0
        %350 = vmatpush2.msra.mxu0 0.0
        %351 = vmatprep.subr.mxu0 0.0
        %352 = vmatpush2.msra.mxu0 0.0
        %353 = vmatprep.subr.mxu0 0.0
        %354 = vmatpush2.msra.mxu0 0.0
        %355 = vmatprep.subr.mxu0 0.0
        %356 = vmatpush2.msra.mxu0 0.0
        %357 = vmatprep.subr.mxu0 0.0
        %358 = vmatpush2.msra.mxu0 0.0
        %359 = vmatprep.subr.mxu0 0.0
        %360 = vmatpush2.msra.mxu0 0.0
        %361 = vmatprep.subr.mxu0 0.0
        %362 = vmatpush2.msra.mxu0 0.0
        %363 = vmatprep.subr.mxu0 0.0
        %364 = vmatpush2.msra.mxu0 0.0
        %365 = vmatprep.subr.mxu0 0.0
        %366 = vmatpush2.msra.mxu0 0.0
        %367 = vmatprep.subr.mxu0 0.0
        %368 = vmatpush2.msra.mxu0 0.0
        %369 = vmatprep.mubr.f32.mxu0 0.0
        %370 = vmatmul.mubr.f32.gmra.mxu0 %v301
        %v371 = vpop.f32.mrf.mxu0
        %v372 = vadd.f32 0.0, %v371
        %v373 = vpop.f32.mrf.mxu0
        %374 = vmatprep.mubr.f32.mxu0 0.0
        %375 = vmatmul.mubr.f32.gmra.mxu0 %v303
        %v376 = vpop.f32.mrf.mxu0
        %v377 = vadd.f32 0.0, %v376
        %v378 = vpop.f32.mrf.mxu0
        %379 = vdwg.mxu0
        %v380 = vsel %vm300, %v279, 0
        %v382 = vsel %vm300, %v280, 0
        %384 = vmatprep.subr.mxu0 0.0
        %385 = vmatpush1.msra.mxu0 0.0
        %386 = vmatprep.subr.mxu0 0.0
        %387 = vmatpush1.msra.mxu0 0.0
        %388 = vmatprep.subr.mxu0 0.0
        %389 = vmatpush1.msra.mxu0 0.0
        %390 = vmatprep.subr.mxu0 0.0
        %391 = vmatpush1.msra.mxu0 0.0
        %392 = vmatprep.subr.mxu0 0.0
        %393 = vmatpush1.msra.mxu0 0.0
        %394 = vmatprep.subr.mxu0 0.0
        %395 = vmatpush1.msra.mxu0 0.0
        %396 = vmatprep.subr.mxu0 0.0
        %397 = vmatpush1.msra.mxu0 0.0
        %398 = vmatprep.subr.mxu0 0.0
        %399 = vmatpush1.msra.mxu0 0.0
        %400 = vmatprep.subr.mxu0 0.0
        %401 = vmatpush1.msra.mxu0 0.0
        %402 = vmatprep.subr.mxu0 0.0
        %403 = vmatpush1.msra.mxu0 0.0
        %404 = vmatprep.subr.mxu0 0.0
        %405 = vmatpush1.msra.mxu0 0.0
        %406 = vmatprep.subr.mxu0 0.0
        %407 = vmatpush1.msra.mxu0 0.0
        %408 = vmatprep.subr.mxu0 0.0
        %409 = vmatpush1.msra.mxu0 %v285
        %410 = vmatprep.subr.mxu0 0.0
        %411 = vmatpush1.msra.mxu0 %v284
        %412 = vmatprep.subr.mxu0 0.0
        %413 = vmatpush1.msra.mxu0 %v283
        %414 = vmatprep.subr.mxu0 0.0
        %415 = vmatpush1.msra.mxu0 %v282
        %416 = vmatprep.subr.mxu0 0.0
        %417 = vmatpush2.msra.mxu0 0.0
        %418 = vmatprep.subr.mxu0 0.0
        %419 = vmatpush2.msra.mxu0 0.0
        %420 = vmatprep.subr.mxu0 0.0
        %421 = vmatpush2.msra.mxu0 0.0
        %422 = vmatprep.subr.mxu0 0.0
        %423 = vmatpush2.msra.mxu0 0.0
        %424 = vmatprep.subr.mxu0 0.0
        %425 = vmatpush2.msra.mxu0 0.0
        %426 = vmatprep.subr.mxu0 0.0
        %427 = vmatpush2.msra.mxu0 0.0
        %428 = vmatprep.subr.mxu0 0.0
        %429 = vmatpush2.msra.mxu0 0.0
        %430 = vmatprep.subr.mxu0 0.0
        %431 = vmatpush2.msra.mxu0 0.0
        %432 = vmatprep.subr.mxu0 0.0
        %433 = vmatpush2.msra.mxu0 0.0
        %434 = vmatprep.subr.mxu0 0.0
        %435 = vmatpush2.msra.mxu0 0.0
        %436 = vmatprep.subr.mxu0 0.0
        %437 = vmatpush2.msra.mxu0 0.0
        %438 = vmatprep.subr.mxu0 0.0
        %439 = vmatpush2.msra.mxu0 0.0
        %440 = vmatprep.subr.mxu0 0.0
        %441 = vmatpush2.msra.mxu0 0.0
        %442 = vmatprep.subr.mxu0 0.0
        %443 = vmatpush2.msra.mxu0 0.0
        %444 = vmatprep.subr.mxu0 0.0
        %445 = vmatpush2.msra.mxu0 0.0
        %446 = vmatprep.subr.mxu0 0.0
        %447 = vmatpush2.msra.mxu0 0.0
        %448 = vmatprep.mubr.f32.mxu0 0.0
        %449 = vmatmul.mubr.f32.gmra.mxu0 %v380
        %v450 = vpop.f32.mrf.mxu0
        %v451 = vadd.f32 %v372, %v450
        %v452 = vpop.f32.mrf.mxu0
        %453 = vmatprep.mubr.f32.mxu0 0.0
        %454 = vmatmul.mubr.f32.gmra.mxu0 %v382
        %v455 = vpop.f32.mrf.mxu0
        %v456 = vadd.f32 %v377, %v455
        %v457 = vpop.f32.mrf.mxu0
        %458 = vdwg.mxu0
        %s459 = scalar_lea.vmem [#allocation2], 64
        %v460 = vld [vmem:[%s459] sm:$0xff]
        %v461 = vld [vmem:[%s459 + $0x8] sm:$0xff]
        %v462 = vld [vmem:[%s459 + $0x10] sm:$0xff]
        %v463 = vld [vmem:[%s459 + $0x18] sm:$0xff]
        %vm464 = vcmask 1045504
        %v465 = vrot.slane %v279, 2
        %v466 = vrot.slane %v280, 2
        %v467 = vsel %vm464, %v465, %v466
        %v468 = vrot.slane %v281, 2
        %v469 = vsel %vm464, %v466, %v468
        %v470 = vsel %vm300, %v467, 0
        %v472 = vsel %vm300, %v469, 0
        %474 = vmatprep.subr.mxu0 0.0
        %475 = vmatpush1.msra.mxu0 0.0
        %476 = vmatprep.subr.mxu0 0.0
        %477 = vmatpush1.msra.mxu0 0.0
        %478 = vmatprep.subr.mxu0 0.0
        %479 = vmatpush1.msra.mxu0 0.0
        %480 = vmatprep.subr.mxu0 0.0
        %481 = vmatpush1.msra.mxu0 0.0
        %482 = vmatprep.subr.mxu0 0.0
        %483 = vmatpush1.msra.mxu0 0.0
        %484 = vmatprep.subr.mxu0 0.0
        %485 = vmatpush1.msra.mxu0 0.0
        %486 = vmatprep.subr.mxu0 0.0
        %487 = vmatpush1.msra.mxu0 0.0
        %488 = vmatprep.subr.mxu0 0.0
        %489 = vmatpush1.msra.mxu0 0.0
        %490 = vmatprep.subr.mxu0 0.0
        %491 = vmatpush1.msra.mxu0 0.0
        %492 = vmatprep.subr.mxu0 0.0
        %493 = vmatpush1.msra.mxu0 0.0
        %494 = vmatprep.subr.mxu0 0.0
        %495 = vmatpush1.msra.mxu0 0.0
        %496 = vmatprep.subr.mxu0 0.0
        %497 = vmatpush1.msra.mxu0 0.0
        %498 = vmatprep.subr.mxu0 0.0
        %499 = vmatpush1.msra.mxu0 %v463
        %500 = vmatprep.subr.mxu0 0.0
        %501 = vmatpush1.msra.mxu0 %v462
        %502 = vmatprep.subr.mxu0 0.0
        %503 = vmatpush1.msra.mxu0 %v461
        %504 = vmatprep.subr.mxu0 0.0
        %505 = vmatpush1.msra.mxu0 %v460
        %506 = vmatprep.subr.mxu0 0.0
        %507 = vmatpush2.msra.mxu0 0.0
        %508 = vmatprep.subr.mxu0 0.0
        %509 = vmatpush2.msra.mxu0 0.0
        %510 = vmatprep.subr.mxu0 0.0
        %511 = vmatpush2.msra.mxu0 0.0
        %512 = vmatprep.subr.mxu0 0.0
        %513 = vmatpush2.msra.mxu0 0.0
        %514 = vmatprep.subr.mxu0 0.0
        %515 = vmatpush2.msra.mxu0 0.0
        %516 = vmatprep.subr.mxu0 0.0
        %517 = vmatpush2.msra.mxu0 0.0
        %518 = vmatprep.subr.mxu0 0.0
        %519 = vmatpush2.msra.mxu0 0.0
        %520 = vmatprep.subr.mxu0 0.0
        %521 = vmatpush2.msra.mxu0 0.0
        %522 = vmatprep.subr.mxu0 0.0
        %523 = vmatpush2.msra.mxu0 0.0
        %524 = vmatprep.subr.mxu0 0.0
        %525 = vmatpush2.msra.mxu0 0.0
        %526 = vmatprep.subr.mxu0 0.0
        %527 = vmatpush2.msra.mxu0 0.0
        %528 = vmatprep.subr.mxu0 0.0
        %529 = vmatpush2.msra.mxu0 0.0
        %530 = vmatprep.subr.mxu0 0.0
        %531 = vmatpush2.msra.mxu0 0.0
        %532 = vmatprep.subr.mxu0 0.0
        %533 = vmatpush2.msra.mxu0 0.0
        %534 = vmatprep.subr.mxu0 0.0
        %535 = vmatpush2.msra.mxu0 0.0
        %536 = vmatprep.subr.mxu0 0.0
        %537 = vmatpush2.msra.mxu0 0.0
        %538 = vmatprep.mubr.f32.mxu0 0.0
        %539 = vmatmul.mubr.f32.gmra.mxu0 %v470
        %v540 = vpop.f32.mrf.mxu0
        %v541 = vadd.f32 0.0, %v540
        %v542 = vpop.f32.mrf.mxu0
        %543 = vmatprep.mubr.f32.mxu0 0.0
        %544 = vmatmul.mubr.f32.gmra.mxu0 %v472
        %v545 = vpop.f32.mrf.mxu0
        %v546 = vadd.f32 0.0, %v545
        %v547 = vpop.f32.mrf.mxu0
        %548 = vdwg.mxu0
        %v549 = vadd.f32 %v451, %v541
        %v550 = vadd.f32 %v456, %v546
        %s551 = scalar_lea.vmem [#allocation2], 96
        %v552 = vld [vmem:[%s551] sm:$0xff]
        %v553 = vld [vmem:[%s551 + $0x8] sm:$0xff]
        %v554 = vld [vmem:[%s551 + $0x10] sm:$0xff]
        %v555 = vld [vmem:[%s551 + $0x18] sm:$0xff]
        %vm556 = vcmask 1044480
        %v557 = vrot.slane %v279, 3
        %v558 = vrot.slane %v280, 3
        %v559 = vsel %vm556, %v557, %v558
        %v560 = vrot.slane %v281, 3
        %v561 = vsel %vm556, %v558, %v560
        %v562 = vsel %vm300, %v559, 0
        %v564 = vsel %vm300, %v561, 0
        %566 = vmatprep.subr.mxu0 0.0
        %567 = vmatpush1.msra.mxu0 0.0
        %568 = vmatprep.subr.mxu0 0.0
        %569 = vmatpush1.msra.mxu0 0.0
        %570 = vmatprep.subr.mxu0 0.0
        %571 = vmatpush1.msra.mxu0 0.0
        %572 = vmatprep.subr.mxu0 0.0
        %573 = vmatpush1.msra.mxu0 0.0
        %574 = vmatprep.subr.mxu0 0.0
        %575 = vmatpush1.msra.mxu0 0.0
        %576 = vmatprep.subr.mxu0 0.0
        %577 = vmatpush1.msra.mxu0 0.0
        %578 = vmatprep.subr.mxu0 0.0
        %579 = vmatpush1.msra.mxu0 0.0
        %580 = vmatprep.subr.mxu0 0.0
        %581 = vmatpush1.msra.mxu0 0.0
        %582 = vmatprep.subr.mxu0 0.0
        %583 = vmatpush1.msra.mxu0 0.0
        %584 = vmatprep.subr.mxu0 0.0
        %585 = vmatpush1.msra.mxu0 0.0
        %586 = vmatprep.subr.mxu0 0.0
        %587 = vmatpush1.msra.mxu0 0.0
        %588 = vmatprep.subr.mxu0 0.0
        %589 = vmatpush1.msra.mxu0 0.0
        %590 = vmatprep.subr.mxu0 0.0
        %591 = vmatpush1.msra.mxu0 %v555
        %592 = vmatprep.subr.mxu0 0.0
        %593 = vmatpush1.msra.mxu0 %v554
        %594 = vmatprep.subr.mxu0 0.0
        %595 = vmatpush1.msra.mxu0 %v553
        %596 = vmatprep.subr.mxu0 0.0
        %597 = vmatpush1.msra.mxu0 %v552
        %598 = vmatprep.subr.mxu0 0.0
        %599 = vmatpush2.msra.mxu0 0.0
        %600 = vmatprep.subr.mxu0 0.0
        %601 = vmatpush2.msra.mxu0 0.0
        %602 = vmatprep.subr.mxu0 0.0
        %603 = vmatpush2.msra.mxu0 0.0
        %604 = vmatprep.subr.mxu0 0.0
        %605 = vmatpush2.msra.mxu0 0.0
        %606 = vmatprep.subr.mxu0 0.0
        %607 = vmatpush2.msra.mxu0 0.0
        %608 = vmatprep.subr.mxu0 0.0
        %609 = vmatpush2.msra.mxu0 0.0
        %610 = vmatprep.subr.mxu0 0.0
        %611 = vmatpush2.msra.mxu0 0.0
        %612 = vmatprep.subr.mxu0 0.0
        %613 = vmatpush2.msra.mxu0 0.0
        %614 = vmatprep.subr.mxu0 0.0
        %615 = vmatpush2.msra.mxu0 0.0
        %616 = vmatprep.subr.mxu0 0.0
        %617 = vmatpush2.msra.mxu0 0.0
        %618 = vmatprep.subr.mxu0 0.0
        %619 = vmatpush2.msra.mxu0 0.0
        %620 = vmatprep.subr.mxu0 0.0
        %621 = vmatpush2.msra.mxu0 0.0
        %622 = vmatprep.subr.mxu0 0.0
        %623 = vmatpush2.msra.mxu0 0.0
        %624 = vmatprep.subr.mxu0 0.0
        %625 = vmatpush2.msra.mxu0 0.0
        %626 = vmatprep.subr.mxu0 0.0
        %627 = vmatpush2.msra.mxu0 0.0
        %628 = vmatprep.subr.mxu0 0.0
        %629 = vmatpush2.msra.mxu0 0.0
        %630 = vmatprep.mubr.f32.mxu0 0.0
        %631 = vmatmul.mubr.f32.gmra.mxu0 %v562
        %v632 = vpop.f32.mrf.mxu0
        %v633 = vadd.f32 0.0, %v632
        %v634 = vpop.f32.mrf.mxu0
        %635 = vmatprep.mubr.f32.mxu0 0.0
        %636 = vmatmul.mubr.f32.gmra.mxu0 %v564
        %v637 = vpop.f32.mrf.mxu0
        %v638 = vadd.f32 0.0, %v637
        %v639 = vpop.f32.mrf.mxu0
        %640 = vdwg.mxu0
        %v641 = vadd.f32 %v549, %v633
        %v642 = vadd.f32 %v550, %v638
        %s643 = scalar_lea.vmem [#allocation2], 128
        %v644 = vld [vmem:[%s643] sm:$0xff]
        %v645 = vld [vmem:[%s643 + $0x8] sm:$0xff]
        %v646 = vld [vmem:[%s643 + $0x10] sm:$0xff]
        %v647 = vld [vmem:[%s643 + $0x18] sm:$0xff]
        %vm648 = vcmask 1043456
        %v649 = vrot.slane %v279, 4
        %v650 = vrot.slane %v280, 4
        %v651 = vsel %vm648, %v649, %v650
        %v652 = vrot.slane %v281, 4
        %v653 = vsel %vm648, %v650, %v652
        %v654 = vsel %vm300, %v651, 0
        %v656 = vsel %vm300, %v653, 0
        %658 = vmatprep.subr.mxu0 0.0
        %659 = vmatpush1.msra.mxu0 0.0
        %660 = vmatprep.subr.mxu0 0.0
        %661 = vmatpush1.msra.mxu0 0.0
        %662 = vmatprep.subr.mxu0 0.0
        %663 = vmatpush1.msra.mxu0 0.0
        %664 = vmatprep.subr.mxu0 0.0
        %665 = vmatpush1.msra.mxu0 0.0
        %666 = vmatprep.subr.mxu0 0.0
        %667 = vmatpush1.msra.mxu0 0.0
        %668 = vmatprep.subr.mxu0 0.0
        %669 = vmatpush1.msra.mxu0 0.0
        %670 = vmatprep.subr.mxu0 0.0
        %671 = vmatpush1.msra.mxu0 0.0
        %672 = vmatprep.subr.mxu0 0.0
        %673 = vmatpush1.msra.mxu0 0.0
        %674 = vmatprep.subr.mxu0 0.0
        %675 = vmatpush1.msra.mxu0 0.0
        %676 = vmatprep.subr.mxu0 0.0
        %677 = vmatpush1.msra.mxu0 0.0
        %678 = vmatprep.subr.mxu0 0.0
        %679 = vmatpush1.msra.mxu0 0.0
        %680 = vmatprep.subr.mxu0 0.0
        %681 = vmatpush1.msra.mxu0 0.0
        %682 = vmatprep.subr.mxu0 0.0
        %683 = vmatpush1.msra.mxu0 %v647
        %684 = vmatprep.subr.mxu0 0.0
        %685 = vmatpush1.msra.mxu0 %v646
        %686 = vmatprep.subr.mxu0 0.0
        %687 = vmatpush1.msra.mxu0 %v645
        %688 = vmatprep.subr.mxu0 0.0
        %689 = vmatpush1.msra.mxu0 %v644
        %690 = vmatprep.subr.mxu0 0.0
        %691 = vmatpush2.msra.mxu0 0.0
        %692 = vmatprep.subr.mxu0 0.0
        %693 = vmatpush2.msra.mxu0 0.0
        %694 = vmatprep.subr.mxu0 0.0
        %695 = vmatpush2.msra.mxu0 0.0
        %696 = vmatprep.subr.mxu0 0.0
        %697 = vmatpush2.msra.mxu0 0.0
        %698 = vmatprep.subr.mxu0 0.0
        %699 = vmatpush2.msra.mxu0 0.0
        %700 = vmatprep.subr.mxu0 0.0
        %701 = vmatpush2.msra.mxu0 0.0
        %702 = vmatprep.subr.mxu0 0.0
        %703 = vmatpush2.msra.mxu0 0.0
        %704 = vmatprep.subr.mxu0 0.0
        %705 = vmatpush2.msra.mxu0 0.0
        %706 = vmatprep.subr.mxu0 0.0
        %707 = vmatpush2.msra.mxu0 0.0
        %708 = vmatprep.subr.mxu0 0.0
        %709 = vmatpush2.msra.mxu0 0.0
        %710 = vmatprep.subr.mxu0 0.0
        %711 = vmatpush2.msra.mxu0 0.0
        %712 = vmatprep.subr.mxu0 0.0
        %713 = vmatpush2.msra.mxu0 0.0
        %714 = vmatprep.subr.mxu0 0.0
        %715 = vmatpush2.msra.mxu0 0.0
        %716 = vmatprep.subr.mxu0 0.0
        %717 = vmatpush2.msra.mxu0 0.0
        %718 = vmatprep.subr.mxu0 0.0
        %719 = vmatpush2.msra.mxu0 0.0
        %720 = vmatprep.subr.mxu0 0.0
        %721 = vmatpush2.msra.mxu0 0.0
        %722 = vmatprep.mubr.f32.mxu0 0.0
        %723 = vmatmul.mubr.f32.gmra.mxu0 %v654
        %v724 = vpop.f32.mrf.mxu0
        %v725 = vadd.f32 0.0, %v724
        %v726 = vpop.f32.mrf.mxu0
        %727 = vmatprep.mubr.f32.mxu0 0.0
        %728 = vmatmul.mubr.f32.gmra.mxu0 %v656
        %v729 = vpop.f32.mrf.mxu0
        %v730 = vadd.f32 0.0, %v729
        %v731 = vpop.f32.mrf.mxu0
        %732 = vdwg.mxu0
        %v733 = vadd.f32 %v641, %v725
        %v734 = vadd.f32 %v642, %v730
        %v735 = vld [vmem:[%s2] sm:$0x1]
        %v737 = vlaneseq
        %v738 = vshrl.u32 %v737, 7
        %v739 = vsub.s32 0, %v738
        %v740 = vrot.slane %v735, %v739
        %v742 = vadd.f32 %v733, %v740
        %v743 = vadd.f32 %v734, %v740
        %v744 = vmax.f32 %v742, 0.0
        %v745 = vmax.f32 %v743, 0.0
        %v746 = vld [vmem:[%s3] sm:$0xff]
        %v747 = vld [vmem:[%s3 + $0x8] sm:$0xff]
        %v748 = vadd.f32 %v744, %v746
        %v749 = vadd.f32 %v745, %v747
        %v750 = vmax.f32 %v748, %v749
        %v751 = vrot.slane %v750, 4
        %v752 = vmax.f32 %v750, %v751
        %v753 = vrot.slane %v752, 2
        %v754 = vmax.f32 %v752, %v753
        %v755 = vrot.slane %v754, 1
        %v756 = vmax.f32 %v754, %v755
        %v757 = vld [vmem:[#allocation5] sm:$0xff]
        %v758 = vld [vmem:[#allocation5 + $0x8] sm:$0xff]
        %v759 = vld [vmem:[#allocation5 + $0x10] sm:$0xff]
        %v760 = vld [vmem:[#allocation5 + $0x18] sm:$0xff]
        %v761 = vld [vmem:[#allocation5 + $0x20] sm:$0xff]
        %v762 = vld [vmem:[#allocation5 + $0x28] sm:$0xff]
        %v763 = vld [vmem:[#allocation5 + $0x30] sm:$0xff]
        %v764 = vld [vmem:[#allocation5 + $0x38] sm:$0xff]
        %v765 = vld [vmem:[#allocation5 + $0x40] sm:$0xff]
        %v766 = vld [vmem:[#allocation5 + $0x48] sm:$0xff]
        %v767 = vld [vmem:[#allocation5 + $0x50] sm:$0xff]
        %v768 = vld [vmem:[#allocation5 + $0x58] sm:$0xff]
        %v769 = vld [vmem:[#allocation5 + $0x60] sm:$0xff]
        %v770 = vld [vmem:[#allocation5 + $0x68] sm:$0xff]
        %v771 = vld [vmem:[#allocation5 + $0x70] sm:$0xff]
        %v772 = vld [vmem:[#allocation5 + $0x78] sm:$0xff]
        %v773 = vld [vmem:[%s5] sm:$0x1]
        %774 = vmatprep.subr.mxu0 0.0
        %775 = vmatpush1.msra.mxu0 %v772
        %776 = vmatprep.subr.mxu0 0.0
        %777 = vmatpush1.msra.mxu0 %v771
        %778 = vmatprep.subr.mxu0 0.0
        %779 = vmatpush1.msra.mxu0 %v770
        %780 = vmatprep.subr.mxu0 0.0
        %781 = vmatpush1.msra.mxu0 %v769
        %782 = vmatprep.subr.mxu0 0.0
        %783 = vmatpush1.msra.mxu0 %v768
        %784 = vmatprep.subr.mxu0 0.0
        %785 = vmatpush1.msra.mxu0 %v767
        %786 = vmatprep.subr.mxu0 0.0
        %787 = vmatpush1.msra.mxu0 %v766
        %788 = vmatprep.subr.mxu0 0.0
        %789 = vmatpush1.msra.mxu0 %v765
        %790 = vmatprep.subr.mxu0 0.0
        %791 = vmatpush1.msra.mxu0 %v764
        %792 = vmatprep.subr.mxu0 0.0
        %793 = vmatpush1.msra.mxu0 %v763
        %794 = vmatprep.subr.mxu0 0.0
        %795 = vmatpush1.msra.mxu0 %v762
        %796 = vmatprep.subr.mxu0 0.0
        %797 = vmatpush1.msra.mxu0 %v761
        %798 = vmatprep.subr.mxu0 0.0
        %799 = vmatpush1.msra.mxu0 %v760
        %800 = vmatprep.subr.mxu0 0.0
        %801 = vmatpush1.msra.mxu0 %v759
        %802 = vmatprep.subr.mxu0 0.0
        %803 = vmatpush1.msra.mxu0 %v758
        %804 = vmatprep.subr.mxu0 0.0
        %805 = vmatpush1.msra.mxu0 %v757
        %806 = vmatprep.subr.mxu0 0.0
        %807 = vmatpush2.msra.mxu0 0.0
        %808 = vmatprep.subr.mxu0 0.0
        %809 = vmatpush2.msra.mxu0 0.0
        %810 = vmatprep.subr.mxu0 0.0
        %811 = vmatpush2.msra.mxu0 0.0
        %812 = vmatprep.subr.mxu0 0.0
        %813 = vmatpush2.msra.mxu0 0.0
        %814 = vmatprep.subr.mxu0 0.0
        %815 = vmatpush2.msra.mxu0 0.0
        %816 = vmatprep.subr.mxu0 0.0
        %817 = vmatpush2.msra.mxu0 0.0
        %818 = vmatprep.subr.mxu0 0.0
        %819 = vmatpush2.msra.mxu0 0.0
        %820 = vmatprep.subr.mxu0 0.0
        %821 = vmatpush2.msra.mxu0 0.0
        %822 = vmatprep.subr.mxu0 0.0
        %823 = vmatpush2.msra.mxu0 0.0
        %824 = vmatprep.subr.mxu0 0.0
        %825 = vmatpush2.msra.mxu0 0.0
        %826 = vmatprep.subr.mxu0 0.0
        %827 = vmatpush2.msra.mxu0 0.0
        %828 = vmatprep.subr.mxu0 0.0
        %829 = vmatpush2.msra.mxu0 0.0
        %830 = vmatprep.subr.mxu0 0.0
        %831 = vmatpush2.msra.mxu0 0.0
        %832 = vmatprep.subr.mxu0 0.0
        %833 = vmatpush2.msra.mxu0 0.0
        %834 = vmatprep.subr.mxu0 0.0
        %835 = vmatpush2.msra.mxu0 0.0
        %836 = vmatprep.subr.mxu0 0.0
        %837 = vmatpush2.msra.mxu0 0.0
        %838 = vmatprep.mubr.f32.mxu0 0.0
        %839 = vmatmul.mubr.f32.gmra.mxu0 %v756
        %v840 = vpop.f32.mrf.mxu0
        %v841 = vadd.f32 %v773, %v840
        %v842 = vpop.f32.mrf.mxu0
        %843 = vdwg.mxu0
        %844 = vst [vmem:[%s273] sm:$0x1] %v841
        %s845 = sand.u32 %s161, 1
        %s846 = scalar_lea.sflag [#allocation4], %s845
        %s847 = sand.u32 %s161, 1
        %s848 = scalar_lea.vmem [#allocation7], %s847
        // Predicated region
        $region53: #{tpu_custom_call.1} parent=43 // pred_check
          %p849 = pneg %p171
        $region54: #{tpu_custom_call.1} parent=43 // pred_check_branch
          %851 = sbr.rel (%p849) target = $region56
        $region55: #{tpu_custom_call.1} parent=43 // pred_region
          %s853 = ssub.s32 16, 16
          %854 = vsyncadd %s846, %s853
          %s855 = smul.addr %s22, 16
          %s856 = scalar_lea.hbm %s6, %s855
          %s858 = sshll.u32 %s848, 4
          %s859 = int_to_ptr.vmem [resolvable:$true] %s858
          %861 = dma.vmem_to_hbm [thread:$0]  %s859, 16, %s856, %s846
        $region56: #{tpu_custom_call.1} parent=43 // pred_fallthru
          _
      $region44: #{tpu_custom_call.1} parent=5 // pred_fallthru
        _
      %p862 = scmp.le.s32.totalorder 2, %s17
      // Predicated region
      $region57: #{tpu_custom_call.1} parent=5 // pred_check
        %p863 = pneg %p862
      $region58: #{tpu_custom_call.1} parent=5 // pred_check_branch
        %865 = sbr.rel (%p863) target = $region60
      $region59: #{tpu_custom_call.1} parent=5 // pred_region
        %s866 = ssub.s32 %s17, 2
        // Predicated region
        $region61: #{tpu_custom_call.1} parent=59 // pred_check
          %p867 = pneg %p177
        $region62: #{tpu_custom_call.1} parent=59 // pred_check_branch
          %869 = sbr.rel (%p867) target = $region64
        $region63: #{tpu_custom_call.1} parent=59 // pred_region
          %s870 = sand.u32 %s162, 1
          %s871 = scalar_lea.sflag [#allocation4], %s870
          %s872 = sand.u32 %s162, 1
          %s873 = scalar_lea.vmem [#allocation7], %s872
          %874 = dma.done %s871, 16
        $region64: #{tpu_custom_call.1} parent=59 // pred_fallthru
          _
      $region60: #{tpu_custom_call.1} parent=5 // pred_fallthru
        _
    $region6: #{tpu_custom_call.1} parent=1 // loop_footer
      %s21 = sadd.s32 1, %s17
    $region7: #{tpu_custom_call.1} parent=1 // loop_footer_branch
      %16 = sbr.rel target = $region3
    $region8: #{tpu_custom_call.1} parent=1 // loop_exit
      _
    %875 = vsyncpa [#allocation3], 1
    %s876 = scalar_lea.sflag [#allocation3], 1
    %877 = vsyncpa %s876, 1
    %878 = vsyncpa [#allocation6], 1
    %879 = vsyncpa [#allocation4], 1
    %s880 = scalar_lea.sflag [#allocation4], 1
    %881 = vsyncpa %s880, 1

</llo_original>
